<compile_context>
chip_gen: v5e
topology: v5e:2x2
jax: 0.10.0
libtpu: 0.0.40
codegen_flags: <defaults>
</compile_context>

<pallas_src>
import functools

import jax
import jax.numpy as jnp
from jax.experimental import pallas as pl
from jax.experimental.pallas import tpu as pltpu


def _round_up(x, m):
    return (x + m - 1) // m * m


def _vae_kernel(
    x_ref, eps_ref,
    w1_ref, b1_ref,
    w2_ref, b2_ref,      # fused [mu | logvar | zero-pad] head: [inter, 2*latent + pad]
    w3_ref, b3_ref,
    w4_ref, b4_ref,
    out_ref,             # packed lane-dense output: [recon | mu | logvar | pad]
):
    latent_dim = eps_ref.shape[-1]

    x = x_ref[...]
    eps = eps_ref[...]

    # ---- encode: h = relu(x @ W1 + b1)  (bf16 MXU operands, f32 accumulation) ----
    h = jnp.dot(x.astype(jnp.bfloat16), w1_ref[...],
                preferred_element_type=jnp.float32) + b1_ref[...]
    h = jnp.maximum(h, 0.0)

    # fused mu/logvar head: one matmul -> [TM, 2*latent + pad] = [mu | logvar | 0]
    ml = jnp.dot(h.astype(jnp.bfloat16), w2_ref[...],
                 preferred_element_type=jnp.float32) + b2_ref[...]
    mu = ml[:, :latent_dim]
    logvar = ml[:, latent_dim:2 * latent_dim]

    # ---- reparameterize: z = mu + eps * exp(0.5 * logvar)  (f32 elementwise) ----
    std = jnp.exp(0.5 * logvar)
    z = mu + eps * std

    # ---- decode: sigmoid(relu(z @ W3 + b3) @ W4 + b4) ----
    h2 = jnp.dot(z.astype(jnp.bfloat16), w3_ref[...],
                 preferred_element_type=jnp.float32) + b3_ref[...]
    h2 = jnp.maximum(h2, 0.0)
    logits = jnp.dot(h2.astype(jnp.bfloat16), w4_ref[...],
                     preferred_element_type=jnp.float32) + b4_ref[...]
    recon = jax.nn.sigmoid(logits)

    # single lane-dense store of the packed [recon | mu | logvar | pad] tile
    out_ref[...] = jnp.concatenate([recon, ml], axis=-1).astype(out_ref.dtype)


def prepare_params(params):
    """One-time layout prep (do NOT redo per call):
    transpose to [in, out], fuse the mu/logvar head, zero-pad the fused head so the packed
    output width (original_dim + 2*latent + pad) is a multiple of 128 (lane-dense store),
    bf16 weights, [1, out] f32 biases."""
    original_dim = params["w4"].shape[0]
    latent_dim = params["w21"].shape[0]
    packed_raw = original_dim + 2 * latent_dim
    head_pad = _round_up(packed_raw, 128) - packed_raw

    w1 = params["w1"].T.astype(jnp.bfloat16)
    w2 = jnp.concatenate([params["w21"].T, params["w22"].T], axis=1)
    b2 = jnp.concatenate([params["b21"], params["b22"]])
    if head_pad:
        w2 = jnp.pad(w2, ((0, 0), (0, head_pad)))
        b2 = jnp.pad(b2, (0, head_pad))
    w2 = w2.astype(jnp.bfloat16)
    w3 = params["w3"].T.astype(jnp.bfloat16)
    w4 = params["w4"].T.astype(jnp.bfloat16)
    b1 = params["b1"][None, :].astype(jnp.float32)
    b2 = b2[None, :].astype(jnp.float32)
    b3 = params["b3"][None, :].astype(jnp.float32)
    b4 = params["b4"][None, :].astype(jnp.float32)
    return (w1, b1, w2, b2, w3, b3, w4, b4)


@functools.partial(jax.jit, static_argnames=("tm", "out_dtype"))
def vae_forward_packed(x, eps, prepared, *, tm=512, out_dtype=jnp.float32):
    """Preferred entry point.  x: [B, original_dim] f32, eps: [B, latent_dim] f32
    (the torch.randn_like noise).  Returns the PACKED buffer
    [Bp, round_up(original_dim + 2*latent, 128)] = [recon | mu | logvar | pad];
    slice it inside the downstream (loss) jit via unpack_outputs so the slices fuse
    with their consumers instead of becoming extra HBM copy passes."""
    w1, b1, w2, b2, w3, b3, w4, b4 = prepared
    B, original_dim = x.shape
    packed_dim = original_dim + w2.shape[1]   # recon + (2*latent + head_pad), multiple of 128

    # Batch tile: multiple of 8 (sublane), default 512 (HBM-roofline sweet spot),
    # capped at the padded batch.
    B8 = _round_up(B, 8)
    tm = _round_up(max(8, min(tm, B8)), 8)
    # v7x megacore: ensure the "parallel" grid has >= 2 steps when the batch allows it,
    # so both TensorCores get work.
    if B8 >= 16 and B8 // tm < 2:
        tm = _round_up(-(-B8 // 2), 8)
    Bp = _round_up(B, tm)
    if Bp != B:
        pad = Bp - B
        x = jnp.pad(x, ((0, pad), (0, 0)))
        eps = jnp.pad(eps, ((0, pad), (0, 0)))

    grid = (Bp // tm,)
    batched = lambda shape: pl.BlockSpec(shape, lambda i: (i, 0))   # per-tile pipelined DMA
    resident = lambda a: pl.BlockSpec(a.shape, lambda i: (0, 0))    # VMEM-resident weights
    # TODO(synk): on v7x, pipeline_mode=pl.Buffered(1) on the resident weight specs would
    # halve resident-weight VMEM at production widths; left at the default for portability.

    in_arrays = (x, eps, w1, b1, w2, b2, w3, b3, w4, b4)
    in_specs = [
        batched((tm, original_dim)),
        batched((tm, eps.shape[1])),
        resident(w1), resident(b1),
        resident(w2), resident(b2),
        resident(w3), resident(b3),
        resident(w4), resident(b4),
    ]

    packed = pl.pallas_call(
        _vae_kernel,
        out_shape=jax.ShapeDtypeStruct((Bp, packed_dim), out_dtype),
        grid=grid,
        in_specs=in_specs,
        out_specs=batched((tm, packed_dim)),
        compiler_params=pltpu.CompilerParams(
            dimension_semantics=("parallel",),      # megacore sharding on v7x
            vmem_limit_bytes=32 * 1024 * 1024,      # explicit budget (v7x-safe)
        ),
    )(*in_arrays)
    return packed


def unpack_outputs(packed, batch, original_dim, latent_dim):
    """Slice the packed buffer back into (recon, mu, logvar).
    Call this INSIDE the downstream (loss) jit so the slices fuse with their consumers."""
    recon = packed[:batch, :original_dim]
    mu = packed[:batch, original_dim:original_dim + latent_dim]
    logvar = packed[:batch, original_dim + latent_dim:original_dim + 2 * latent_dim]
    return recon, mu, logvar


def vae_forward(x, eps, prepared, *, tm=512, out_dtype=jnp.float32):
    """Convenience wrapper returning (recon, mu, logvar). Prefer vae_forward_packed +
    unpack_outputs fused into the consumer jit for production use."""
    packed = vae_forward_packed(x, eps, prepared, tm=tm, out_dtype=out_dtype)
    return unpack_outputs(packed, x.shape[0], x.shape[1], eps.shape[1])


def init_params(key, original_dim, intermediate_dim, latent_dim):
    """Deterministic init matching the nn.Linear shapes of the PyTorch module."""
    ks = jax.random.split(key, 10)

    def lin(kw, kb, out_dim, in_dim):
        bound = 1.0 / jnp.sqrt(in_dim)
        w = jax.random.uniform(kw, (out_dim, in_dim), jnp.float32, -bound, bound)
        b = jax.random.uniform(kb, (out_dim,), jnp.float32, -bound, bound)
        return w, b

    w1, b1 = lin(ks[0], ks[1], intermediate_dim, original_dim)
    w21, b21 = lin(ks[2], ks[3], latent_dim, intermediate_dim)
    w22, b22 = lin(ks[4], ks[5], latent_dim, intermediate_dim)
    w3, b3 = lin(ks[6], ks[7], intermediate_dim, latent_dim)
    w4, b4 = lin(ks[8], ks[9], original_dim, intermediate_dim)
    return {
        "w1": w1, "b1": b1, "w21": w21, "b21": b21, "w22": w22, "b22": b22,
        "w3": w3, "b3": b3, "w4": w4, "b4": b4,
    }


def vae_reference(x, eps, params):
    """Pure-JAX f32 reference matching PyTorch semantics exactly."""
    h = jax.nn.relu(x @ params["w1"].T + params["b1"])
    mu = h @ params["w21"].T + params["b21"]
    logvar = h @ params["w22"].T + params["b22"]
    std = jnp.exp(0.5 * logvar)
    z = mu + eps * std
    h2 = jax.nn.relu(z @ params["w3"].T + params["b3"])
    recon = jax.nn.sigmoid(h2 @ params["w4"].T + params["b4"])
    return recon, mu, logvar


def _run_case(key, batch, original_dim, intermediate_dim, latent_dim):
    kx, keps, kp = jax.random.split(key, 3)
    x = jax.random.uniform(kx, (batch, original_dim), jnp.float32)
    # TODO(synk): torch.randn_like(std) is supplied as explicit eps (deterministic); an
    # in-kernel pltpu.prng_seed/prng_random_bits Box-Muller draw would remove this input
    # DMA but changes the RNG stream vs. the PyTorch module.
    eps = jax.random.normal(keps, (batch, latent_dim), jnp.float32)
    params = init_params(kp, original_dim, intermediate_dim, latent_dim)
    prepared = prepare_params(params)

    recon, mu, logvar = vae_forward(x, eps, prepared)
    jax.block_until_ready((recon, mu, logvar))

    r_ref, mu_ref, lv_ref = vae_reference(x, eps, params)
    assert recon.shape == (batch, original_dim)
    assert mu.shape == (batch, latent_dim) and logvar.shape == (batch, latent_dim)
    # bf16 MXU operands (f32 accumulation) -> loosened tolerance vs the f32 reference.
    assert jnp.allclose(recon, r_ref, atol=2e-2), float(jnp.max(jnp.abs(recon - r_ref)))
    assert jnp.allclose(mu, mu_ref, atol=2e-2), float(jnp.max(jnp.abs(mu - mu_ref)))
    assert jnp.allclose(logvar, lv_ref, atol=2e-2), float(jnp.max(jnp.abs(logvar - lv_ref)))


if __name__ == "__main__":
    beta = 1.0  # only affects the loss in the original module, not the forward pass
    key = jax.random.PRNGKey(0)
    k1, k2 = jax.random.split(key)

    # Case 1: packed width already 128 (64 + 2*32); exercises the >=2-grid-step rule
    # (batch 16 -> tm clamped to 8 -> grid=(2,)).
    _run_case(k1, batch=16, original_dim=64, intermediate_dim=128, latent_dim=32)

    # Case 2: non-aligned dims (72 + 2*20 = 112 -> padded to 128) and a ragged batch
    # (20 -> padded to 32, grid=(2,)); exercises the lane-dense padding + batch padding paths.
    _run_case(k2, batch=20, original_dim=72, intermediate_dim=96, latent_dim=20)

    print("KERNEL_OK")
</pallas_src>

<mosaic_0001>
module attributes {stable_mosaic.version = 11 : i64} {
  func.func @_vae_kernel(%arg0: i32, %arg1: memref<8x64xf32, #tpu.memory_space<vmem>>, %arg2: memref<8x32xf32, #tpu.memory_space<vmem>>, %arg3: memref<64x128xbf16, #tpu.memory_space<vmem>>, %arg4: memref<1x128xf32, #tpu.memory_space<vmem>>, %arg5: memref<128x64xbf16, #tpu.memory_space<vmem>>, %arg6: memref<1x64xf32, #tpu.memory_space<vmem>>, %arg7: memref<32x128xbf16, #tpu.memory_space<vmem>>, %arg8: memref<1x128xf32, #tpu.memory_space<vmem>>, %arg9: memref<128x64xbf16, #tpu.memory_space<vmem>>, %arg10: memref<1x64xf32, #tpu.memory_space<vmem>>, %arg11: memref<8x128xf32, #tpu.memory_space<vmem>>) attributes {dimension_semantics = [#tpu.dimension_semantics<parallel>], iteration_bounds = array<i64: 2>, scalar_prefetch = 0 : i64, scratch_operands = 0 : i64, tpu.core_type = #tpu.core_type<tc>, window_params = [{transform_indices = @transform_0, window_bounds = array<i64: 8, 64>}, {transform_indices = @transform_1, window_bounds = array<i64: 8, 32>}, {pipeline_mode = #tpu.pipeline_mode<synchronous>, transform_indices = @transform_2, window_bounds = array<i64: 64, 128>}, {pipeline_mode = #tpu.pipeline_mode<synchronous>, transform_indices = @transform_3, window_bounds = array<i64: 1, 128>}, {pipeline_mode = #tpu.pipeline_mode<synchronous>, transform_indices = @transform_4, window_bounds = array<i64: 128, 64>}, {pipeline_mode = #tpu.pipeline_mode<synchronous>, transform_indices = @transform_5, window_bounds = array<i64: 1, 64>}, {pipeline_mode = #tpu.pipeline_mode<synchronous>, transform_indices = @transform_6, window_bounds = array<i64: 32, 128>}, {pipeline_mode = #tpu.pipeline_mode<synchronous>, transform_indices = @transform_7, window_bounds = array<i64: 1, 128>}, {pipeline_mode = #tpu.pipeline_mode<synchronous>, transform_indices = @transform_8, window_bounds = array<i64: 128, 64>}, {pipeline_mode = #tpu.pipeline_mode<synchronous>, transform_indices = @transform_9, window_bounds = array<i64: 1, 64>}, {transform_indices = @transform_10, window_bounds = array<i64: 8, 128>}]} {
    %c0 = arith.constant 0 : index
    %c0_0 = arith.constant 0 : index
    %0 = vector.load %arg1[%c0, %c0_0] : memref<8x64xf32, #tpu.memory_space<vmem>>, vector<8x64xf32>
    %c0_1 = arith.constant 0 : index
    %c0_2 = arith.constant 0 : index
    %1 = vector.load %arg2[%c0_1, %c0_2] : memref<8x32xf32, #tpu.memory_space<vmem>>, vector<8x32xf32>
    %2 = arith.truncf %0 : vector<8x64xf32> to vector<8x64xbf16>
    %c0_3 = arith.constant 0 : index
    %c0_4 = arith.constant 0 : index
    %3 = vector.load %arg3[%c0_3, %c0_4] : memref<64x128xbf16, #tpu.memory_space<vmem>>, vector<64x128xbf16>
    %cst = arith.constant dense<0.000000e+00> : vector<8x128xf32>
    %4 = tpu.matmul %2, %3, %cst {dimension_numbers = #tpu.dot_dimension_numbers<[1], [0], [0], [1], [0, 0, 1, 1], [], []>} : vector<8x64xbf16>, vector<64x128xbf16>, vector<8x128xf32> -> vector<8x128xf32>
    %c0_5 = arith.constant 0 : index
    %c0_6 = arith.constant 0 : index
    %5 = vector.load %arg4[%c0_5, %c0_6] : memref<1x128xf32, #tpu.memory_space<vmem>>, vector<1x128xf32>
    %6 = vector.broadcast %5 : vector<1x128xf32> to vector<8x128xf32>
    %7 = arith.addf %4, %6 : vector<8x128xf32>
    %cst_7 = arith.constant 0.000000e+00 : f32
    %8 = vector.broadcast %cst_7 : f32 to vector<8x128xf32>
    %9 = arith.maximumf %7, %8 : vector<8x128xf32>
    %10 = arith.truncf %9 : vector<8x128xf32> to vector<8x128xbf16>
    %c0_8 = arith.constant 0 : index
    %c0_9 = arith.constant 0 : index
    %11 = vector.load %arg5[%c0_8, %c0_9] : memref<128x64xbf16, #tpu.memory_space<vmem>>, vector<128x64xbf16>
    %cst_10 = arith.constant dense<0.000000e+00> : vector<8x64xf32>
    %12 = tpu.matmul %10, %11, %cst_10 {dimension_numbers = #tpu.dot_dimension_numbers<[1], [0], [0], [1], [0, 0, 1, 1], [], []>} : vector<8x128xbf16>, vector<128x64xbf16>, vector<8x64xf32> -> vector<8x64xf32>
    %c0_11 = arith.constant 0 : index
    %c0_12 = arith.constant 0 : index
    %13 = vector.load %arg6[%c0_11, %c0_12] : memref<1x64xf32, #tpu.memory_space<vmem>>, vector<1x64xf32>
    %14 = vector.broadcast %13 : vector<1x64xf32> to vector<8x64xf32>
    %15 = arith.addf %12, %14 : vector<8x64xf32>
    %16 = vector.extract_strided_slice %15 {offsets = [0, 0], sizes = [8, 32], strides = [1, 1]} : vector<8x64xf32> to vector<8x32xf32>
    %17 = vector.extract_strided_slice %15 {offsets = [0, 32], sizes = [8, 32], strides = [1, 1]} : vector<8x64xf32> to vector<8x32xf32>
    %cst_13 = arith.constant 5.000000e-01 : f32
    %18 = vector.broadcast %cst_13 : f32 to vector<8x32xf32>
    %19 = arith.mulf %18, %17 : vector<8x32xf32>
    %20 = math.exp %19 : vector<8x32xf32>
    %21 = arith.mulf %1, %20 : vector<8x32xf32>
    %22 = arith.addf %16, %21 : vector<8x32xf32>
    %23 = arith.truncf %22 : vector<8x32xf32> to vector<8x32xbf16>
    %c0_14 = arith.constant 0 : index
    %c0_15 = arith.constant 0 : index
    %24 = vector.load %arg7[%c0_14, %c0_15] : memref<32x128xbf16, #tpu.memory_space<vmem>>, vector<32x128xbf16>
    %cst_16 = arith.constant dense<0.000000e+00> : vector<8x128xf32>
    %25 = tpu.matmul %23, %24, %cst_16 {dimension_numbers = #tpu.dot_dimension_numbers<[1], [0], [0], [1], [0, 0, 1, 1], [], []>} : vector<8x32xbf16>, vector<32x128xbf16>, vector<8x128xf32> -> vector<8x128xf32>
    %c0_17 = arith.constant 0 : index
    %c0_18 = arith.constant 0 : index
    %26 = vector.load %arg8[%c0_17, %c0_18] : memref<1x128xf32, #tpu.memory_space<vmem>>, vector<1x128xf32>
    %27 = vector.broadcast %26 : vector<1x128xf32> to vector<8x128xf32>
    %28 = arith.addf %25, %27 : vector<8x128xf32>
    %cst_19 = arith.constant 0.000000e+00 : f32
    %29 = vector.broadcast %cst_19 : f32 to vector<8x128xf32>
    %30 = arith.maximumf %28, %29 : vector<8x128xf32>
    %31 = arith.truncf %30 : vector<8x128xf32> to vector<8x128xbf16>
    %c0_20 = arith.constant 0 : index
    %c0_21 = arith.constant 0 : index
    %32 = vector.load %arg9[%c0_20, %c0_21] : memref<128x64xbf16, #tpu.memory_space<vmem>>, vector<128x64xbf16>
    %cst_22 = arith.constant dense<0.000000e+00> : vector<8x64xf32>
    %33 = tpu.matmul %31, %32, %cst_22 {dimension_numbers = #tpu.dot_dimension_numbers<[1], [0], [0], [1], [0, 0, 1, 1], [], []>} : vector<8x128xbf16>, vector<128x64xbf16>, vector<8x64xf32> -> vector<8x64xf32>
    %c0_23 = arith.constant 0 : index
    %c0_24 = arith.constant 0 : index
    %34 = vector.load %arg10[%c0_23, %c0_24] : memref<1x64xf32, #tpu.memory_space<vmem>>, vector<1x64xf32>
    %35 = vector.broadcast %34 : vector<1x64xf32> to vector<8x64xf32>
    %36 = arith.addf %33, %35 : vector<8x64xf32>
    %37 = arith.negf %36 : vector<8x64xf32>
    %38 = math.exp %37 : vector<8x64xf32>
    %cst_25 = arith.constant 1.000000e+00 : f32
    %39 = vector.broadcast %cst_25 : f32 to vector<8x64xf32>
    %40 = arith.addf %39, %38 : vector<8x64xf32>
    %41 = arith.divf %39, %40 : vector<8x64xf32>
    %42 = tpu.concatenate %41, %15 in 1 : vector<8x64xf32>, vector<8x64xf32> -> vector<8x128xf32>
    %c0_26 = arith.constant 0 : index
    %c0_27 = arith.constant 0 : index
    %43 = vector.load %arg11[%c0_26, %c0_27] : memref<8x128xf32, #tpu.memory_space<vmem>>, vector<8x128xf32>
    tpu.vector_store %arg11[%c0_26, %c0_27], %42 {strides = array<i32>} : memref<8x128xf32, #tpu.memory_space<vmem>>, vector<8x128xf32>,
    return
  }
  func.func @transform_0(%arg0: i32) -> (i32, i32) {
    %c0_i32 = arith.constant 0 : i32
    %c0_i32_0 = arith.constant 0 : i32
    return %arg0, %c0_i32 : i32, i32
  }
  func.func @transform_1(%arg0: i32) -> (i32, i32) {
    %c0_i32 = arith.constant 0 : i32
    %c0_i32_0 = arith.constant 0 : i32
    return %arg0, %c0_i32 : i32, i32
  }
  func.func @transform_2(%arg0: i32) -> (i32, i32) {
    %c0_i32 = arith.constant 0 : i32
    %c0_i32_0 = arith.constant 0 : i32
    %c0_i32_1 = arith.constant 0 : i32
    return %c0_i32, %c0_i32_0 : i32, i32
  }
  func.func @transform_3(%arg0: i32) -> (i32, i32) {
    %c0_i32 = arith.constant 0 : i32
    %c0_i32_0 = arith.constant 0 : i32
    %c0_i32_1 = arith.constant 0 : i32
    return %c0_i32, %c0_i32_0 : i32, i32
  }
  func.func @transform_4(%arg0: i32) -> (i32, i32) {
    %c0_i32 = arith.constant 0 : i32
    %c0_i32_0 = arith.constant 0 : i32
    %c0_i32_1 = arith.constant 0 : i32
    return %c0_i32, %c0_i32_0 : i32, i32
  }
  func.func @transform_5(%arg0: i32) -> (i32, i32) {
    %c0_i32 = arith.constant 0 : i32
    %c0_i32_0 = arith.constant 0 : i32
    %c0_i32_1 = arith.constant 0 : i32
    return %c0_i32, %c0_i32_0 : i32, i32
  }
  func.func @transform_6(%arg0: i32) -> (i32, i32) {
    %c0_i32 = arith.constant 0 : i32
    %c0_i32_0 = arith.constant 0 : i32
    %c0_i32_1 = arith.constant 0 : i32
    return %c0_i32, %c0_i32_0 : i32, i32
  }
  func.func @transform_7(%arg0: i32) -> (i32, i32) {
    %c0_i32 = arith.constant 0 : i32
    %c0_i32_0 = arith.constant 0 : i32
    %c0_i32_1 = arith.constant 0 : i32
    return %c0_i32, %c0_i32_0 : i32, i32
  }
  func.func @transform_8(%arg0: i32) -> (i32, i32) {
    %c0_i32 = arith.constant 0 : i32
    %c0_i32_0 = arith.constant 0 : i32
    %c0_i32_1 = arith.constant 0 : i32
    return %c0_i32, %c0_i32_0 : i32, i32
  }
  func.func @transform_9(%arg0: i32) -> (i32, i32) {
    %c0_i32 = arith.constant 0 : i32
    %c0_i32_0 = arith.constant 0 : i32
    %c0_i32_1 = arith.constant 0 : i32
    return %c0_i32, %c0_i32_0 : i32, i32
  }
  func.func @transform_10(%arg0: i32) -> (i32, i32) {
    %c0_i32 = arith.constant 0 : i32
    %c0_i32_0 = arith.constant 0 : i32
    return %arg0, %c0_i32 : i32, i32
  }
}

</mosaic_0001>

<llo_original>
// kernel: vae_forward_packed.1
$region0: #{vae_forward_packed.1}
  #allocation0 [shape = 'u32[]', space=smem, size = 0x4, offset = 0x4, fixed_abs, tag = 'smem constant byte address 0x4 - core index']
  #allocation1 [shape = 'u32[72,128]{1,0:T(1,128)}', space=vmem, size = 0x9000, scoped, tag = 'internal scratch']
  %s0 = inlined_call_operand.vmem [shape: f32[16,64], index: 0, kind: input, shape index: {}]
  %s1 = inlined_call_operand.vmem [shape: f32[16,32], index: 1, kind: input, shape index: {}]
  %s2 = inlined_call_operand.vmem [shape: bf16[64,128], index: 2, kind: input, shape index: {}]
  %s3 = inlined_call_operand.vmem [shape: f32[1,128], index: 3, kind: input, shape index: {}]
  %s4 = inlined_call_operand.vmem [shape: bf16[128,64], index: 4, kind: input, shape index: {}]
  %s5 = inlined_call_operand.vmem [shape: f32[1,64], index: 5, kind: input, shape index: {}]
  %s6 = inlined_call_operand.vmem [shape: bf16[32,128], index: 6, kind: input, shape index: {}]
  %s7 = inlined_call_operand.vmem [shape: f32[1,128], index: 7, kind: input, shape index: {}]
  %s8 = inlined_call_operand.vmem [shape: bf16[128,64], index: 8, kind: input, shape index: {}]
  %s9 = inlined_call_operand.vmem [shape: f32[1,64], index: 9, kind: input, shape index: {}]
  %s10 = inlined_call_operand.hbm [shape: f32[16,128], index: 10, kind: output, shape index: {}]
  %s11 = sld [smem:[#allocation0]]
  $region73: #{vae_forward_packed.1} parent=0
    _
  %s13 = ssub.s32 1, %s11
  %s14 = scalar_select 0, %s13, %s11
  $region1: #{vae_forward_packed.1} parent=0
    #allocation2 [shape = 'u8[8192]{0}', space=vmem, size = 0x2000, scoped, tag = 'output window, operand 0']
    #allocation3 [shape = 's32[2]{0}', space=sflag, size = 0x8, scoped, tag = 'scoped memory for vae_forward_packed.1']
    %15 = vsyncpa [#allocation3], 0
    %s16 = scalar_lea.sflag [#allocation3], 1
    %17 = vsyncpa %s16, 0
    loop: start=0, step=1, limit=4
    $region2: #{vae_forward_packed.1} parent=1 // loop_pre_header
      _
    $region3: #{vae_forward_packed.1} parent=1 // loop_header
      %s19 = sphi 0, %s23
      %p20 = scmp.ge.s32.totalorder %s19, 4
      %s29 = sphi 0, %s31
      %s32 = sphi 0, %s29
      %s33 = sphi 0, %s32
      %s49 = sphi 0, %s33
      %s55 = sphi 0, %s57
      %s58 = sphi 0, %s55
      %s59 = sphi 0, %s58
      %s75 = sphi 0, %s59
      %s79 = sphi 0, %s79
      %s81 = sphi 0, %s79
      %s82 = sphi 0, %s81
      %s96 = sphi 0, %s82
      %s100 = sphi 0, %s100
      %s102 = sphi 0, %s100
      %s103 = sphi 0, %s102
      %s117 = sphi 0, %s103
      %s121 = sphi 0, %s121
      %s123 = sphi 0, %s121
      %s124 = sphi 0, %s123
      %s138 = sphi 0, %s124
      %s142 = sphi 0, %s142
      %s144 = sphi 0, %s142
      %s145 = sphi 0, %s144
      %s159 = sphi 0, %s145
      %s163 = sphi 0, %s163
      %s165 = sphi 0, %s163
      %s166 = sphi 0, %s165
      %s180 = sphi 0, %s166
      %s184 = sphi 0, %s184
      %s186 = sphi 0, %s184
      %s187 = sphi 0, %s186
      %s201 = sphi 0, %s187
      %s205 = sphi 0, %s205
      %s207 = sphi 0, %s205
      %s208 = sphi 0, %s207
      %s222 = sphi 0, %s208
      %s226 = sphi 0, %s226
      %s228 = sphi 0, %s226
      %s229 = sphi 0, %s228
      %s243 = sphi 0, %s229
      %s249 = sphi 0, %s251
      %s252 = sphi 0, %s249
      %s253 = sphi 0, %s252
      %s269 = sphi 0, %s253
    $region4: #{vae_forward_packed.1} parent=1 // loop_header_branch
      %22 = sbr.rel (%p20) target = $region8
    $region5: #{vae_forward_packed.1} parent=1 // loop_body
      %s24 = ssub.s32 %s19, 1
      %s25 = ssub.s32 %s19, 2
      %s26 = sadd.s32 %s19, 1
      %s27 = ssub.s32 %s19, %s26
      %p28 = scmp.eq.s32.totalorder %s27, 0
      %s30 = sadd.s32 %s29, 1
      %s31 = scalar_select %p28, %s29, %s30
      %p34 = pneg %p28
      %p35 = scmp.eq.s32.totalorder %s19, 1
      %p36 = por %p34, %p35
      %p37 = scmp.ne.s32.totalorder %s29, %s32
      %p38 = scmp.eq.s32.totalorder %s19, 0
      %p39 = por %p37, %p38
      %p40 = scmp.ne.s32.totalorder %s29, %s32
      %p41 = scmp.eq.s32.totalorder %s24, 1
      %p42 = por %p40, %p41
      %p43 = scmp.ne.s32.totalorder %s32, %s33
      %p44 = scmp.eq.s32.totalorder %s24, 0
      %p45 = por %p43, %p44
      %p46 = scmp.ne.s32.totalorder %s32, %s33
      %p47 = scmp.eq.s32.totalorder %s25, 1
      %p48 = por %p46, %p47
      %p50 = scmp.ne.s32.totalorder %s33, %s49
      %p51 = scmp.eq.s32.totalorder %s25, 0
      %p52 = por %p50, %p51
      %s53 = ssub.s32 %s19, %s26
      %p54 = scmp.eq.s32.totalorder %s53, 0
      %s56 = sadd.s32 %s55, 1
      %s57 = scalar_select %p54, %s55, %s56
      %p60 = pneg %p54
      %p61 = scmp.eq.s32.totalorder %s19, 1
      %p62 = por %p60, %p61
      %p63 = scmp.ne.s32.totalorder %s55, %s58
      %p64 = scmp.eq.s32.totalorder %s19, 0
      %p65 = por %p63, %p64
      %p66 = scmp.ne.s32.totalorder %s55, %s58
      %p67 = scmp.eq.s32.totalorder %s24, 1
      %p68 = por %p66, %p67
      %p69 = scmp.ne.s32.totalorder %s58, %s59
      %p70 = scmp.eq.s32.totalorder %s24, 0
      %p71 = por %p69, %p70
      %p72 = scmp.ne.s32.totalorder %s58, %s59
      %p73 = scmp.eq.s32.totalorder %s25, 1
      %p74 = por %p72, %p73
      %p76 = scmp.ne.s32.totalorder %s59, %s75
      %p77 = scmp.eq.s32.totalorder %s25, 0
      %p78 = por %p76, %p77
      %s80 = sadd.s32 %s79, 1
      %p83 = scmp.eq.s32.totalorder %s19, 1
      %p84 = scmp.ne.s32.totalorder %s79, %s81
      %p85 = scmp.eq.s32.totalorder %s19, 0
      %p86 = por %p84, %p85
      %p87 = scmp.ne.s32.totalorder %s79, %s81
      %p88 = scmp.eq.s32.totalorder %s24, 1
      %p89 = por %p87, %p88
      %p90 = scmp.ne.s32.totalorder %s81, %s82
      %p91 = scmp.eq.s32.totalorder %s24, 0
      %p92 = por %p90, %p91
      %p93 = scmp.ne.s32.totalorder %s81, %s82
      %p94 = scmp.eq.s32.totalorder %s25, 1
      %p95 = por %p93, %p94
      %p97 = scmp.ne.s32.totalorder %s82, %s96
      %p98 = scmp.eq.s32.totalorder %s25, 0
      %p99 = por %p97, %p98
      %s101 = sadd.s32 %s100, 1
      %p104 = scmp.eq.s32.totalorder %s19, 1
      %p105 = scmp.ne.s32.totalorder %s100, %s102
      %p106 = scmp.eq.s32.totalorder %s19, 0
      %p107 = por %p105, %p106
      %p108 = scmp.ne.s32.totalorder %s100, %s102
      %p109 = scmp.eq.s32.totalorder %s24, 1
      %p110 = por %p108, %p109
      %p111 = scmp.ne.s32.totalorder %s102, %s103
      %p112 = scmp.eq.s32.totalorder %s24, 0
      %p113 = por %p111, %p112
      %p114 = scmp.ne.s32.totalorder %s102, %s103
      %p115 = scmp.eq.s32.totalorder %s25, 1
      %p116 = por %p114, %p115
      %p118 = scmp.ne.s32.totalorder %s103, %s117
      %p119 = scmp.eq.s32.totalorder %s25, 0
      %p120 = por %p118, %p119
      %s122 = sadd.s32 %s121, 1
      %p125 = scmp.eq.s32.totalorder %s19, 1
      %p126 = scmp.ne.s32.totalorder %s121, %s123
      %p127 = scmp.eq.s32.totalorder %s19, 0
      %p128 = por %p126, %p127
      %p129 = scmp.ne.s32.totalorder %s121, %s123
      %p130 = scmp.eq.s32.totalorder %s24, 1
      %p131 = por %p129, %p130
      %p132 = scmp.ne.s32.totalorder %s123, %s124
      %p133 = scmp.eq.s32.totalorder %s24, 0
      %p134 = por %p132, %p133
      %p135 = scmp.ne.s32.totalorder %s123, %s124
      %p136 = scmp.eq.s32.totalorder %s25, 1
      %p137 = por %p135, %p136
      %p139 = scmp.ne.s32.totalorder %s124, %s138
      %p140 = scmp.eq.s32.totalorder %s25, 0
      %p141 = por %p139, %p140
      %s143 = sadd.s32 %s142, 1
      %p146 = scmp.eq.s32.totalorder %s19, 1
      %p147 = scmp.ne.s32.totalorder %s142, %s144
      %p148 = scmp.eq.s32.totalorder %s19, 0
      %p149 = por %p147, %p148
      %p150 = scmp.ne.s32.totalorder %s142, %s144
      %p151 = scmp.eq.s32.totalorder %s24, 1
      %p152 = por %p150, %p151
      %p153 = scmp.ne.s32.totalorder %s144, %s145
      %p154 = scmp.eq.s32.totalorder %s24, 0
      %p155 = por %p153, %p154
      %p156 = scmp.ne.s32.totalorder %s144, %s145
      %p157 = scmp.eq.s32.totalorder %s25, 1
      %p158 = por %p156, %p157
      %p160 = scmp.ne.s32.totalorder %s145, %s159
      %p161 = scmp.eq.s32.totalorder %s25, 0
      %p162 = por %p160, %p161
      %s164 = sadd.s32 %s163, 1
      %p167 = scmp.eq.s32.totalorder %s19, 1
      %p168 = scmp.ne.s32.totalorder %s163, %s165
      %p169 = scmp.eq.s32.totalorder %s19, 0
      %p170 = por %p168, %p169
      %p171 = scmp.ne.s32.totalorder %s163, %s165
      %p172 = scmp.eq.s32.totalorder %s24, 1
      %p173 = por %p171, %p172
      %p174 = scmp.ne.s32.totalorder %s165, %s166
      %p175 = scmp.eq.s32.totalorder %s24, 0
      %p176 = por %p174, %p175
      %p177 = scmp.ne.s32.totalorder %s165, %s166
      %p178 = scmp.eq.s32.totalorder %s25, 1
      %p179 = por %p177, %p178
      %p181 = scmp.ne.s32.totalorder %s166, %s180
      %p182 = scmp.eq.s32.totalorder %s25, 0
      %p183 = por %p181, %p182
      %s185 = sadd.s32 %s184, 1
      %p188 = scmp.eq.s32.totalorder %s19, 1
      %p189 = scmp.ne.s32.totalorder %s184, %s186
      %p190 = scmp.eq.s32.totalorder %s19, 0
      %p191 = por %p189, %p190
      %p192 = scmp.ne.s32.totalorder %s184, %s186
      %p193 = scmp.eq.s32.totalorder %s24, 1
      %p194 = por %p192, %p193
      %p195 = scmp.ne.s32.totalorder %s186, %s187
      %p196 = scmp.eq.s32.totalorder %s24, 0
      %p197 = por %p195, %p196
      %p198 = scmp.ne.s32.totalorder %s186, %s187
      %p199 = scmp.eq.s32.totalorder %s25, 1
      %p200 = por %p198, %p199
      %p202 = scmp.ne.s32.totalorder %s187, %s201
      %p203 = scmp.eq.s32.totalorder %s25, 0
      %p204 = por %p202, %p203
      %s206 = sadd.s32 %s205, 1
      %p209 = scmp.eq.s32.totalorder %s19, 1
      %p210 = scmp.ne.s32.totalorder %s205, %s207
      %p211 = scmp.eq.s32.totalorder %s19, 0
      %p212 = por %p210, %p211
      %p213 = scmp.ne.s32.totalorder %s205, %s207
      %p214 = scmp.eq.s32.totalorder %s24, 1
      %p215 = por %p213, %p214
      %p216 = scmp.ne.s32.totalorder %s207, %s208
      %p217 = scmp.eq.s32.totalorder %s24, 0
      %p218 = por %p216, %p217
      %p219 = scmp.ne.s32.totalorder %s207, %s208
      %p220 = scmp.eq.s32.totalorder %s25, 1
      %p221 = por %p219, %p220
      %p223 = scmp.ne.s32.totalorder %s208, %s222
      %p224 = scmp.eq.s32.totalorder %s25, 0
      %p225 = por %p223, %p224
      %s227 = sadd.s32 %s226, 1
      %p230 = scmp.eq.s32.totalorder %s19, 1
      %p231 = scmp.ne.s32.totalorder %s226, %s228
      %p232 = scmp.eq.s32.totalorder %s19, 0
      %p233 = por %p231, %p232
      %p234 = scmp.ne.s32.totalorder %s226, %s228
      %p235 = scmp.eq.s32.totalorder %s24, 1
      %p236 = por %p234, %p235
      %p237 = scmp.ne.s32.totalorder %s228, %s229
      %p238 = scmp.eq.s32.totalorder %s24, 0
      %p239 = por %p237, %p238
      %p240 = scmp.ne.s32.totalorder %s228, %s229
      %p241 = scmp.eq.s32.totalorder %s25, 1
      %p242 = por %p240, %p241
      %p244 = scmp.ne.s32.totalorder %s229, %s243
      %p245 = scmp.eq.s32.totalorder %s25, 0
      %p246 = por %p244, %p245
      %s247 = ssub.s32 %s19, %s26
      %p248 = scmp.eq.s32.totalorder %s247, 0
      %s250 = sadd.s32 %s249, 1
      %s251 = scalar_select %p248, %s249, %s250
      %p254 = pneg %p248
      %p255 = scmp.eq.s32.totalorder %s19, 1
      %p256 = por %p254, %p255
      %p257 = scmp.ne.s32.totalorder %s249, %s252
      %p258 = scmp.eq.s32.totalorder %s19, 0
      %p259 = por %p257, %p258
      %p260 = scmp.ne.s32.totalorder %s249, %s252
      %p261 = scmp.eq.s32.totalorder %s24, 1
      %p262 = por %p260, %p261
      %p263 = scmp.ne.s32.totalorder %s252, %s253
      %p264 = scmp.eq.s32.totalorder %s24, 0
      %p265 = por %p263, %p264
      %p266 = scmp.ne.s32.totalorder %s252, %s253
      %p267 = scmp.eq.s32.totalorder %s25, 1
      %p268 = por %p266, %p267
      %p270 = scmp.ne.s32.totalorder %s253, %s269
      %p271 = scmp.eq.s32.totalorder %s25, 0
      %p272 = por %p270, %p271
      %p273 = scmp.le.s32.totalorder 1, %s19
      %p274 = scmp.lt.s32.totalorder %s19, 3
      %p275 = pnand %p273, %p274
      %p276 = pneg %p275
      // Predicated region
      $region9: #{vae_forward_packed.1} parent=5 // pred_check
        _
      $region10: #{vae_forward_packed.1} parent=5 // pred_check_branch
        %278 = sbr.rel (%p275) target = $region12
      $region11: #{vae_forward_packed.1} parent=5 // pred_region
        %s279 = ssub.s32 %s19, 1
        // Predicated region
        $region13: #{vae_forward_packed.1} parent=11 // pred_check
          %p280 = pneg %p92
        $region14: #{vae_forward_packed.1} parent=11 // pred_check_branch
          %282 = sbr.rel (%p280) target = $region16
        $region15: #{vae_forward_packed.1} parent=11 // pred_region
          _
        $region16: #{vae_forward_packed.1} parent=11 // pred_fallthru
          _
        // Predicated region
        $region17: #{vae_forward_packed.1} parent=11 // pred_check
          %p283 = pneg %p113
        $region18: #{vae_forward_packed.1} parent=11 // pred_check_branch
          %285 = sbr.rel (%p283) target = $region20
        $region19: #{vae_forward_packed.1} parent=11 // pred_region
          _
        $region20: #{vae_forward_packed.1} parent=11 // pred_fallthru
          _
        // Predicated region
        $region21: #{vae_forward_packed.1} parent=11 // pred_check
          %p286 = pneg %p134
        $region22: #{vae_forward_packed.1} parent=11 // pred_check_branch
          %288 = sbr.rel (%p286) target = $region24
        $region23: #{vae_forward_packed.1} parent=11 // pred_region
          _
        $region24: #{vae_forward_packed.1} parent=11 // pred_fallthru
          _
        // Predicated region
        $region25: #{vae_forward_packed.1} parent=11 // pred_check
          %p289 = pneg %p155
        $region26: #{vae_forward_packed.1} parent=11 // pred_check_branch
          %291 = sbr.rel (%p289) target = $region28
        $region27: #{vae_forward_packed.1} parent=11 // pred_region
          _
        $region28: #{vae_forward_packed.1} parent=11 // pred_fallthru
          _
        // Predicated region
        $region29: #{vae_forward_packed.1} parent=11 // pred_check
          %p292 = pneg %p176
        $region30: #{vae_forward_packed.1} parent=11 // pred_check_branch
          %294 = sbr.rel (%p292) target = $region32
        $region31: #{vae_forward_packed.1} parent=11 // pred_region
          _
        $region32: #{vae_forward_packed.1} parent=11 // pred_fallthru
          _
        // Predicated region
        $region33: #{vae_forward_packed.1} parent=11 // pred_check
          %p295 = pneg %p197
        $region34: #{vae_forward_packed.1} parent=11 // pred_check_branch
          %297 = sbr.rel (%p295) target = $region36
        $region35: #{vae_forward_packed.1} parent=11 // pred_region
          _
        $region36: #{vae_forward_packed.1} parent=11 // pred_fallthru
          _
        // Predicated region
        $region37: #{vae_forward_packed.1} parent=11 // pred_check
          %p298 = pneg %p218
        $region38: #{vae_forward_packed.1} parent=11 // pred_check_branch
          %300 = sbr.rel (%p298) target = $region40
        $region39: #{vae_forward_packed.1} parent=11 // pred_region
          _
        $region40: #{vae_forward_packed.1} parent=11 // pred_fallthru
          _
        // Predicated region
        $region41: #{vae_forward_packed.1} parent=11 // pred_check
          %p301 = pneg %p239
        $region42: #{vae_forward_packed.1} parent=11 // pred_check_branch
          %303 = sbr.rel (%p301) target = $region44
        $region43: #{vae_forward_packed.1} parent=11 // pred_region
          _
        $region44: #{vae_forward_packed.1} parent=11 // pred_fallthru
          _
      $region12: #{vae_forward_packed.1} parent=5 // pred_fallthru
        _
      %p304 = scmp.lt.s32.totalorder %s19, 2
      // Predicated region
      $region45: #{vae_forward_packed.1} parent=5 // pred_check
        %p305 = pneg %p304
      $region46: #{vae_forward_packed.1} parent=5 // pred_check_branch
        %307 = sbr.rel (%p305) target = $region48
      $region47: #{vae_forward_packed.1} parent=5 // pred_region
        // Predicated region
        $region49: #{vae_forward_packed.1} parent=47 // pred_check
          %p308 = pneg %p39
        $region50: #{vae_forward_packed.1} parent=47 // pred_check_branch
          %310 = sbr.rel (%p308) target = $region52
        $region51: #{vae_forward_packed.1} parent=47 // pred_region
          %p311 = scmp.lt.s32.totalorder %s19, 1
          %s312 = scalar_select %p311, %s19, 1
          %s313 = smul.addr %s312, 8
          %s314 = scalar_lea.vmem %s0, %s313
        $region52: #{vae_forward_packed.1} parent=47 // pred_fallthru
          _
        // Predicated region
        $region53: #{vae_forward_packed.1} parent=47 // pred_check
          %p315 = pneg %p65
        $region54: #{vae_forward_packed.1} parent=47 // pred_check_branch
          %317 = sbr.rel (%p315) target = $region56
        $region55: #{vae_forward_packed.1} parent=47 // pred_region
          %p318 = scmp.lt.s32.totalorder %s19, 1
          %s319 = scalar_select %p318, %s19, 1
          %s320 = smul.addr %s319, 8
          %s321 = scalar_lea.vmem %s1, %s320
        $region56: #{vae_forward_packed.1} parent=47 // pred_fallthru
          _
      $region48: #{vae_forward_packed.1} parent=5 // pred_fallthru
        _
      %p322 = scmp.le.s32.totalorder 1, %s19
      %p323 = scmp.lt.s32.totalorder %s19, 3
      %p324 = pnand %p322, %p323
      %p325 = pneg %p324
      // Predicated region
      $region57: #{vae_forward_packed.1} parent=5 // pred_check
        _
      $region58: #{vae_forward_packed.1} parent=5 // pred_check_branch
        %327 = sbr.rel (%p324) target = $region60
      $region59: #{vae_forward_packed.1} parent=5 // pred_region
        %s328 = ssub.s32 %s19, 1
        %p329 = scmp.lt.s32.totalorder %s24, 1
        %s330 = scalar_select %p329, %s24, 1
        %s331 = smul.addr %s330, 8
        %s332 = scalar_lea.vmem %s0, %s331
        %p333 = pneg %p45
        %p334 = pneg %p42
        %p335 = scmp.lt.s32.totalorder %s24, 1
        %s336 = scalar_select %p335, %s24, 1
        %s337 = smul.addr %s336, 8
        %s338 = scalar_lea.vmem %s1, %s337
        %p339 = pneg %p71
        %p340 = pneg %p68
        %p341 = pneg %p92
        %p342 = pneg %p89
        %p343 = pneg %p113
        %p344 = pneg %p110
        %p345 = pneg %p134
        %p346 = pneg %p131
        %p347 = pneg %p155
        %p348 = pneg %p152
        %p349 = pneg %p176
        %p350 = pneg %p173
        %p351 = pneg %p197
        %p352 = pneg %p194
        %p353 = pneg %p218
        %p354 = pneg %p215
        %p355 = pneg %p239
        %p356 = pneg %p236
        %p357 = pneg %p265
        %p358 = pneg %p262
        %s359 = sand.u32 %s252, 1
        %s360 = scalar_lea.sflag [#allocation3], %s359
        %s361 = sand.u32 %s252, 1
        %s362 = smul.addr %s361, 8
        %s363 = scalar_lea.vmem [#allocation2], %s362
        %p364 = scmp.lt.s32.totalorder %s24, 1
        %s365 = scalar_select %p364, %s24, 1
        %s366 = smul.addr %s365, 8
        %s367 = scalar_lea.vmem %s0, %s366
        %p368 = scmp.lt.s32.totalorder %s24, 1
        %s369 = scalar_select %p368, %s24, 1
        %s370 = smul.addr %s369, 8
        %s371 = scalar_lea.vmem %s1, %s370
        %v373 = vld [vmem:[%s367] sm:$0xff]
        %v374 = vld [vmem:[%s371] sm:$0xff]
        %v375 = vpack.c.bf16 %v373, %v373
        %v376 = vld [vmem:[%s2] sm:$0xf]
        %v377 = vld [vmem:[%s2 + $0x4] sm:$0xf]
        %v378 = vld [vmem:[%s2 + $0x8] sm:$0xf]
        %v379 = vld [vmem:[%s2 + $0xc] sm:$0xf]
        %v380 = vld [vmem:[%s2 + $0x10] sm:$0xf]
        %v381 = vld [vmem:[%s2 + $0x14] sm:$0xf]
        %v382 = vld [vmem:[%s2 + $0x18] sm:$0xf]
        %v383 = vld [vmem:[%s2 + $0x1c] sm:$0xf]
        %v384 = vld [vmem:[%s3] sm:$0x1]
        %v386 = vperm.slane %v384, 0
        %v396 = vunpack.c.l.b16 %v376
        %v397 = vunpack.c.l.b16 %v377
        %v398 = vunpack.c.l.b16 %v378
        %v399 = vunpack.c.l.b16 %v379
        %v400 = vunpack.c.l.b16 %v380
        %v401 = vunpack.c.l.b16 %v381
        %v402 = vunpack.c.l.b16 %v382
        %v403 = vunpack.c.l.b16 %v383
        %v404 = vpack.c.b16 %v397, %v396
        %v405 = vpack.c.b16 %v399, %v398
        %v406 = vpack.c.b16 %v401, %v400
        %v407 = vpack.c.b16 %v403, %v402
        %vm412 = vcmask 523264
        %v414 = vsel %vm412, %v375, 0
        %416 = vmatpush.bf16.msra.mxu0 0
        %417 = vmatpush.bf16.msra.mxu0 0
        %418 = vmatpush.bf16.msra.mxu0 0
        %419 = vmatpush.bf16.msra.mxu0 0
        %420 = vmatpush.bf16.msra.mxu0 %v407
        %421 = vmatpush.bf16.msra.mxu0 %v406
        %422 = vmatpush.bf16.msra.mxu0 %v405
        %423 = vmatpush.bf16.msra.mxu0 %v404
        %424 = vmatmul.bf16.gmra.mxu0 %v414
        %v425 = vpop.f32.mrf.mxu0
        %v426 = vadd.f32 %v386, %v425
        %v427 = vpop.f32.mrf.mxu0
        %428 = vdwg.mxu0
        %v429 = vmax.f32 %v426, 0.0
        %v430 = vpack.c.bf16 %v429, %v429
        %v431 = vld [vmem:[%s4] sm:$0xf]
        %v432 = vld [vmem:[%s4 + $0x4] sm:$0xf]
        %v433 = vld [vmem:[%s4 + $0x8] sm:$0xf]
        %v434 = vld [vmem:[%s4 + $0xc] sm:$0xf]
        %v435 = vld [vmem:[%s4 + $0x10] sm:$0xf]
        %v436 = vld [vmem:[%s4 + $0x14] sm:$0xf]
        %v437 = vld [vmem:[%s4 + $0x18] sm:$0xf]
        %v438 = vld [vmem:[%s4 + $0x1c] sm:$0xf]
        %v439 = vld [vmem:[%s4 + $0x20] sm:$0xf]
        %v440 = vld [vmem:[%s4 + $0x24] sm:$0xf]
        %v441 = vld [vmem:[%s4 + $0x28] sm:$0xf]
        %v442 = vld [vmem:[%s4 + $0x2c] sm:$0xf]
        %v443 = vld [vmem:[%s4 + $0x30] sm:$0xf]
        %v444 = vld [vmem:[%s4 + $0x34] sm:$0xf]
        %v445 = vld [vmem:[%s4 + $0x38] sm:$0xf]
        %v446 = vld [vmem:[%s4 + $0x3c] sm:$0xf]
        %v447 = vld [vmem:[%s5] sm:$0x1]
        %v449 = vperm.slane %v447, 0
        %v467 = vunpack.c.l.b16 %v431
        %v468 = vunpack.c.l.b16 %v432
        %v469 = vunpack.c.l.b16 %v433
        %v470 = vunpack.c.l.b16 %v434
        %v471 = vunpack.c.l.b16 %v435
        %v472 = vunpack.c.l.b16 %v436
        %v473 = vunpack.c.l.b16 %v437
        %v474 = vunpack.c.l.b16 %v438
        %v475 = vunpack.c.l.b16 %v439
        %v476 = vunpack.c.l.b16 %v440
        %v477 = vunpack.c.l.b16 %v441
        %v478 = vunpack.c.l.b16 %v442
        %v479 = vunpack.c.l.b16 %v443
        %v480 = vunpack.c.l.b16 %v444
        %v481 = vunpack.c.l.b16 %v445
        %v482 = vunpack.c.l.b16 %v446
        %v483 = vpack.c.b16 %v468, %v467
        %v484 = vpack.c.b16 %v470, %v469
        %v485 = vpack.c.b16 %v472, %v471
        %v486 = vpack.c.b16 %v474, %v473
        %v487 = vpack.c.b16 %v476, %v475
        %v488 = vpack.c.b16 %v478, %v477
        %v489 = vpack.c.b16 %v480, %v479
        %v490 = vpack.c.b16 %v482, %v481
        %499 = vmatpush.bf16.msra.mxu0 %v490
        %500 = vmatpush.bf16.msra.mxu0 %v489
        %501 = vmatpush.bf16.msra.mxu0 %v488
        %502 = vmatpush.bf16.msra.mxu0 %v487
        %503 = vmatpush.bf16.msra.mxu0 %v486
        %504 = vmatpush.bf16.msra.mxu0 %v485
        %505 = vmatpush.bf16.msra.mxu0 %v484
        %506 = vmatpush.bf16.msra.mxu0 %v483
        %507 = vmatmul.bf16.gmra.mxu0 %v430
        %v508 = vpop.f32.mrf.mxu0
        %v509 = vadd.f32 %v449, %v508
        %v510 = vpop.f32.mrf.mxu0
        %511 = vdwg.mxu0
        %v512 = vmul.f32 %v509, 0.5
        %v513 = vmul.f32 %v512, 1.442695
        %v514 = vpow.pop %v513
        %516 = vrot.lane.b32.xlu0 %v514, 96
        %v517 = vpop.permute.xlu0 %516
        %v519 = vmul.f32 %v374, %v517
        %v520 = vadd.f32 %v509, %v519
        %v521 = vpack.c.bf16 %v520, %v520
        %v522 = vld [vmem:[%s6] sm:$0xf]
        %v523 = vld [vmem:[%s6 + $0x4] sm:$0xf]
        %v524 = vld [vmem:[%s6 + $0x8] sm:$0xf]
        %v525 = vld [vmem:[%s6 + $0xc] sm:$0xf]
        %v526 = vld [vmem:[%s7] sm:$0x1]
        %v528 = vperm.slane %v526, 0
        %v534 = vunpack.c.l.b16 %v522
        %v535 = vunpack.c.l.b16 %v523
        %v536 = vunpack.c.l.b16 %v524
        %v537 = vunpack.c.l.b16 %v525
        %v538 = vpack.c.b16 %v535, %v534
        %v539 = vpack.c.b16 %v537, %v536
        %vm542 = vcmask 261120
        %v544 = vsel %vm542, %v521, 0
        %546 = vmatpush.bf16.msra.mxu0 0
        %547 = vmatpush.bf16.msra.mxu0 0
        %548 = vmatpush.bf16.msra.mxu0 0
        %549 = vmatpush.bf16.msra.mxu0 0
        %550 = vmatpush.bf16.msra.mxu0 0
        %551 = vmatpush.bf16.msra.mxu0 0
        %552 = vmatpush.bf16.msra.mxu0 %v539
        %553 = vmatpush.bf16.msra.mxu0 %v538
        %554 = vmatmul.bf16.gmra.mxu0 %v544
        %v555 = vpop.f32.mrf.mxu0
        %v556 = vadd.f32 %v528, %v555
        %v557 = vpop.f32.mrf.mxu0
        %558 = vdwg.mxu0
        %v559 = vmax.f32 %v556, 0.0
        %v560 = vpack.c.bf16 %v559, %v559
        %v561 = vld [vmem:[%s8] sm:$0xf]
        %v562 = vld [vmem:[%s8 + $0x4] sm:$0xf]
        %v563 = vld [vmem:[%s8 + $0x8] sm:$0xf]
        %v564 = vld [vmem:[%s8 + $0xc] sm:$0xf]
        %v565 = vld [vmem:[%s8 + $0x10] sm:$0xf]
        %v566 = vld [vmem:[%s8 + $0x14] sm:$0xf]
        %v567 = vld [vmem:[%s8 + $0x18] sm:$0xf]
        %v568 = vld [vmem:[%s8 + $0x1c] sm:$0xf]
        %v569 = vld [vmem:[%s8 + $0x20] sm:$0xf]
        %v570 = vld [vmem:[%s8 + $0x24] sm:$0xf]
        %v571 = vld [vmem:[%s8 + $0x28] sm:$0xf]
        %v572 = vld [vmem:[%s8 + $0x2c] sm:$0xf]
        %v573 = vld [vmem:[%s8 + $0x30] sm:$0xf]
        %v574 = vld [vmem:[%s8 + $0x34] sm:$0xf]
        %v575 = vld [vmem:[%s8 + $0x38] sm:$0xf]
        %v576 = vld [vmem:[%s8 + $0x3c] sm:$0xf]
        %v577 = vld [vmem:[%s9] sm:$0x1]
        %v579 = vperm.slane %v577, 0
        %v597 = vunpack.c.l.b16 %v561
        %v598 = vunpack.c.l.b16 %v562
        %v599 = vunpack.c.l.b16 %v563
        %v600 = vunpack.c.l.b16 %v564
        %v601 = vunpack.c.l.b16 %v565
        %v602 = vunpack.c.l.b16 %v566
        %v603 = vunpack.c.l.b16 %v567
        %v604 = vunpack.c.l.b16 %v568
        %v605 = vunpack.c.l.b16 %v569
        %v606 = vunpack.c.l.b16 %v570
        %v607 = vunpack.c.l.b16 %v571
        %v608 = vunpack.c.l.b16 %v572
        %v609 = vunpack.c.l.b16 %v573
        %v610 = vunpack.c.l.b16 %v574
        %v611 = vunpack.c.l.b16 %v575
        %v612 = vunpack.c.l.b16 %v576
        %v613 = vpack.c.b16 %v598, %v597
        %v614 = vpack.c.b16 %v600, %v599
        %v615 = vpack.c.b16 %v602, %v601
        %v616 = vpack.c.b16 %v604, %v603
        %v617 = vpack.c.b16 %v606, %v605
        %v618 = vpack.c.b16 %v608, %v607
        %v619 = vpack.c.b16 %v610, %v609
        %v620 = vpack.c.b16 %v612, %v611
        %629 = vmatpush.bf16.msra.mxu0 %v620
        %630 = vmatpush.bf16.msra.mxu0 %v619
        %631 = vmatpush.bf16.msra.mxu0 %v618
        %632 = vmatpush.bf16.msra.mxu0 %v617
        %633 = vmatpush.bf16.msra.mxu0 %v616
        %634 = vmatpush.bf16.msra.mxu0 %v615
        %635 = vmatpush.bf16.msra.mxu0 %v614
        %636 = vmatpush.bf16.msra.mxu0 %v613
        %637 = vmatmul.bf16.gmra.mxu0 %v560
        %v638 = vpop.f32.mrf.mxu0
        %v639 = vadd.f32 %v579, %v638
        %v640 = vpop.f32.mrf.mxu0
        %641 = vdwg.mxu0
        %v642 = vxor.u32 %v639, 2147483648
        %v643 = vmul.f32 %v642, 1.442695
        %v644 = vpow.pop %v643
        %v645 = vadd.f32 %v644, 1.0
        %v646 = vrcp.pop %v645
        %v647 = vmul.f32 %v645, %v646
        %v648 = vsub.f32 1.0, %v647
        %v649 = vmul.f32 %v646, %v648
        %v650 = vadd.f32 %v646, %v649
        %vm651 = vweird.f32 %v645
        %vm652 = vweird.f32 %v646
        %vm653 = vmor %vm651, %vm652
        %v654 = vsel %vm653, %v646, %v650
        %v655 = vand.u32 2147483647, %v645
        %vm656 = vcmp.eq.f32.partialorder %v655, 8.507059e+37
        %v657 = vand.u32 %v645, 2147483648
        %v658 = vor.u32 1.1754944e-38, %v657
        %v659 = vsel %vm656, %v658, %v654
        %v660 = vmul.f32 1.0, %v659
        %662 = vrot.lane.b32.xlu0 %v509, 64
        %v663 = vpop.permute.xlu0 %662
        %v665 = vsel %vm412, %v660, %v663
        %666 = vst [vmem:[%s363] sm:$0xff] %v665
        %s667 = sand.u32 %s252, 1
        %s668 = scalar_lea.sflag [#allocation3], %s667
        %s669 = sand.u32 %s252, 1
        %s670 = smul.addr %s669, 8
        %s671 = scalar_lea.vmem [#allocation2], %s670
        // Predicated region
        $region61: #{vae_forward_packed.1} parent=59 // pred_check
          %p672 = pneg %p262
        $region62: #{vae_forward_packed.1} parent=59 // pred_check_branch
          %674 = sbr.rel (%p672) target = $region64
        $region63: #{vae_forward_packed.1} parent=59 // pred_region
          %676 = vsyncadd %s668, 0
          %s677 = smul.addr %s24, 8
          %s678 = scalar_lea.hbm %s10, %s677
          %s680 = sshll.u32 %s671, 4
          %s681 = int_to_ptr.vmem [resolvable:$true] %s680
          %s682 = sshll.u32 %s678, 4
          %s683 = int_to_ptr.hbm [resolvable:$true] %s682
          %685 = dma.vmem_to_hbm [thread:$0]  %s681, 128, %s683, %s668
        $region64: #{vae_forward_packed.1} parent=59 // pred_fallthru
          _
      $region60: #{vae_forward_packed.1} parent=5 // pred_fallthru
        _
      %p686 = scmp.le.s32.totalorder 2, %s19
      // Predicated region
      $region65: #{vae_forward_packed.1} parent=5 // pred_check
        %p687 = pneg %p686
      $region66: #{vae_forward_packed.1} parent=5 // pred_check_branch
        %689 = sbr.rel (%p687) target = $region68
      $region67: #{vae_forward_packed.1} parent=5 // pred_region
        %s690 = ssub.s32 %s19, 2
        // Predicated region
        $region69: #{vae_forward_packed.1} parent=67 // pred_check
          %p691 = pneg %p268
        $region70: #{vae_forward_packed.1} parent=67 // pred_check_branch
          %693 = sbr.rel (%p691) target = $region72
        $region71: #{vae_forward_packed.1} parent=67 // pred_region
          %s694 = sand.u32 %s253, 1
          %s695 = scalar_lea.sflag [#allocation3], %s694
          %s696 = sand.u32 %s253, 1
          %s697 = smul.addr %s696, 8
          %s698 = scalar_lea.vmem [#allocation2], %s697
          %700 = dma.done %s695, 128
        $region72: #{vae_forward_packed.1} parent=67 // pred_fallthru
          _
      $region68: #{vae_forward_packed.1} parent=5 // pred_fallthru
        _
    $region6: #{vae_forward_packed.1} parent=1 // loop_footer
      %s23 = sadd.s32 1, %s19
    $region7: #{vae_forward_packed.1} parent=1 // loop_footer_branch
      %18 = sbr.rel target = $region3
    $region8: #{vae_forward_packed.1} parent=1 // loop_exit
      _
    %701 = vsyncpa [#allocation3], 1
    %s702 = scalar_lea.sflag [#allocation3], 1
    %703 = vsyncpa %s702, 1

</llo_original>
